<compile_context>
chip_gen: v6e
topology: v6e:2x2x1
jax: 0.10.0
libtpu: 0.0.40
codegen_flags: <defaults>
</compile_context>

<pallas_src>
import functools

import jax
import jax.numpy as jnp
from jax.experimental import pallas as pl
from jax.experimental.pallas import tpu as pltpu


# Whole matrices up to this many bytes/array go through the single-block fast
# path (3 resident arrays <= 24 MiB VMEM under the explicit 40 MiB limit).
_FAST_PATH_MAX_BYTES = 8 * 1024 * 1024
# Per-stream block budget on the tiled path (x3 streams x2 buffers ~= 24 MiB).
_TARGET_BLOCK_BYTES = 4 * 1024 * 1024
# v7x megacore balance: aim for at least this many grid steps when tiling.
_MIN_GRID_STEPS = 8
# Explicit scoped-VMEM budget: safe on v5e/v6e (128 MiB phys) and v7x (64 MiB).
_VMEM_LIMIT_BYTES = 40 * 1024 * 1024


# ----------------------------------------------------------------------------
# Kernel body (shared by both paths): out = item - lr * grad, computed in f32,
# cast only at the store. lr is baked in as a compile-time constant.
# ----------------------------------------------------------------------------
def _make_update_kernel(server_lr):
    lr = float(server_lr)

    def kernel(item_ref, grad_ref, out_ref):
        item = item_ref[...].astype(jnp.float32)
        grad = grad_ref[...].astype(jnp.float32)   # fused dtype cast (no extra HBM pass)
        out_ref[...] = (item - lr * grad).astype(out_ref.dtype)

    return kernel


# ----------------------------------------------------------------------------
# Fast path: one full-array block, no grid, HBM buffer donated + aliased.
# ----------------------------------------------------------------------------
@functools.partial(jax.jit, static_argnums=(2,), donate_argnums=(0,))
def _fcf_update_small(item_factor, gradient, server_lr):
    return pl.pallas_call(
        _make_update_kernel(server_lr),
        out_shape=jax.ShapeDtypeStruct(item_factor.shape, item_factor.dtype),
        in_specs=[
            pl.BlockSpec(memory_space=pltpu.MemorySpace.VMEM),   # item_factor
            pl.BlockSpec(memory_space=pltpu.MemorySpace.VMEM),   # gradient
        ],
        out_specs=pl.BlockSpec(memory_space=pltpu.MemorySpace.VMEM),
        input_output_aliases={0: 0},   # reuse the item_factor HBM buffer
        compiler_params=pltpu.CompilerParams(
            vmem_limit_bytes=_VMEM_LIMIT_BYTES),
    )(item_factor, gradient)


# ----------------------------------------------------------------------------
# Tiled path: tile the native (rows, cols) layout directly.
# ----------------------------------------------------------------------------
def _choose_blocks(rows, cols, itemsize):
    """Pick (block_rows, block_cols) for the tiled path (static python ints)."""
    if 8 * cols * itemsize <= _TARGET_BLOCK_BYTES:
        # A full-width 8-row stripe fits the budget: tile rows only, keep the
        # last dim at the full array extent (full-dim exemption -> no %128).
        bc = cols
        br = max(8, (_TARGET_BLOCK_BYTES // (cols * itemsize)) // 8 * 8)
        if br >= rows:
            br = rows                      # whole-dim block (exempt from %8)
        else:
            # Keep >= _MIN_GRID_STEPS steps so v7x shards evenly across 2 TCs.
            while br > 8 and pl.cdiv(rows, br) < _MIN_GRID_STEPS:
                br = max(8, (br // 2) // 8 * 8)
    else:
        # Ultra-wide rows: also tile columns (lane dim must be a multiple of
        # 128 when it is not the full extent); edge blocks are masked.
        br = rows if rows < 8 else 8
        bc = max(128, (_TARGET_BLOCK_BYTES // (max(br, 8) * itemsize)) // 128 * 128)
    return br, bc


@functools.partial(jax.jit, static_argnums=(2,), donate_argnums=(0,))
def _fcf_update_tiled(item_factor, gradient, server_lr):
    rows, cols = item_factor.shape
    dtype = item_factor.dtype
    br, bc = _choose_blocks(rows, cols, dtype.itemsize)
    grid = (pl.cdiv(rows, br), pl.cdiv(cols, bc))

    block_map = lambda i, j: (i, j)
    return pl.pallas_call(
        _make_update_kernel(server_lr),
        out_shape=jax.ShapeDtypeStruct((rows, cols), dtype),
        grid_spec=pltpu.PrefetchScalarGridSpec(
            num_scalar_prefetch=0,
            grid=grid,
            in_specs=[
                pl.BlockSpec((br, bc), block_map),   # item_factor tile
                pl.BlockSpec((br, bc), block_map),   # gradient tile
            ],
            out_specs=pl.BlockSpec((br, bc), block_map),
        ),
        input_output_aliases={0: 0},   # true in-place on the original buffer
        compiler_params=pltpu.CompilerParams(
            dimension_semantics=("parallel", "parallel"),
            vmem_limit_bytes=_VMEM_LIMIT_BYTES),
    )(item_factor, gradient)


def fcf_server_update(item_factor, gradient, server_lr):
    """Pallas implementation of ServerFCFModel.update().

    item_factor: (feature_num, item_num) float
    gradient:    (feature_num, item_num), any float dtype (cast inside kernel)
    server_lr:   python scalar (treated as a compile-time constant)
    returns:     updated item_factor, same shape/dtype (input buffer donated)
    """
    item_factor = jnp.asarray(item_factor)
    gradient = jnp.asarray(gradient)
    assert gradient.shape == item_factor.shape
    server_lr = float(server_lr)
    nbytes = item_factor.size * item_factor.dtype.itemsize
    if item_factor.ndim != 2 or nbytes <= _FAST_PATH_MAX_BYTES:
        return _fcf_update_small(item_factor, gradient, server_lr)
    return _fcf_update_tiled(item_factor, gradient, server_lr)


class ServerFCFModelPallas:
    """JAX/Pallas port of ServerFCFModel."""

    def __init__(self, feature_num, item_num=1682, server_lr=0.1, key=None):
        self.server_lr = float(server_lr)
        if key is None:
            key = jax.random.PRNGKey(0)
        # nn.init.normal_(torch.empty(feature_num, item_num), std=0.35)
        self.item_factor = 0.35 * jax.random.normal(
            key, (feature_num, item_num), dtype=jnp.float32)

    def update(self, gradient):
        # Note: the previous item_factor buffer is donated (in-place update).
        self.item_factor = fcf_server_update(
            self.item_factor, gradient, self.server_lr)

    def get_item_factor(self):
        return self.item_factor

    def forward(self):
        # Reference module's forward is `pass` -> returns None.
        return None


if __name__ == "__main__":
    feature_num = 8       # args.feature_num
    item_num = 1682       # reference item_num (NOT a multiple of 128)
    server_lr = 0.05      # args.server_lr

    key = jax.random.PRNGKey(0)
    k_init, k_grad, k_big, k_bigg, k_wide, k_wgrad = jax.random.split(key, 6)

    # --- Fast path: the reference configuration (8 x 1682, ~53 KiB). ---------
    model = ServerFCFModelPallas(feature_num, item_num, server_lr, key=k_init)
    gradient = jax.random.normal(k_grad, (feature_num, item_num),
                                 dtype=jnp.float32)
    # Compute the plain-JAX reference BEFORE update(): item_factor is donated.
    ref = jax.block_until_ready(model.get_item_factor() - server_lr * gradient)
    model.update(gradient)
    out = jax.block_until_ready(model.get_item_factor())
    assert out.shape == (feature_num, item_num)
    assert jnp.allclose(out, ref, atol=1e-6), "mismatch on fast path"

    # --- Tiled path, row tiling with a ragged leading dim:
    #     (100, 40000) f32 = 16 MiB -> 8-row blocks, grid=(13, 1), last block
    #     overhangs by 4 rows (masked edge store). ---------------------------
    big_item = jax.random.normal(k_big, (100, 40000), dtype=jnp.float32)
    big_grad = jax.random.normal(k_bigg, (100, 40000), dtype=jnp.float32)
    big_ref = jax.block_until_ready(big_item - server_lr * big_grad)
    big_out = jax.block_until_ready(
        fcf_server_update(big_item, big_grad, server_lr))
    assert jnp.allclose(big_out, big_ref, atol=1e-6), "mismatch on row-tiled path"

    # --- Tiled path, column tiling + fused bf16->f32 gradient cast:
    #     (16, 200000) f32 = 12.8 MiB; a single 8-row full-width stripe exceeds
    #     the 4 MiB block budget, so columns are tiled in 131072-lane blocks. --
    wide_item = jax.random.normal(k_wide, (16, 200000), dtype=jnp.float32)
    wide_grad = jax.random.normal(k_wgrad, (16, 200000), dtype=jnp.bfloat16)
    wide_ref = jax.block_until_ready(
        wide_item - server_lr * wide_grad.astype(jnp.float32))
    wide_out = jax.block_until_ready(
        fcf_server_update(wide_item, wide_grad, server_lr))
    assert jnp.allclose(wide_out, wide_ref, atol=1e-6), "mismatch on col-tiled path"

    # forward() is a no-op in the reference module.
    assert model.forward() is None

    print("KERNEL_OK")
</pallas_src>

<mosaic_0001>
module attributes {stable_mosaic.version = 11 : i64} {
  func.func @kernel(%arg0: memref<8x1682xf32, #tpu.memory_space<vmem>>, %arg1: memref<8x1682xf32, #tpu.memory_space<vmem>>, %arg2: memref<8x1682xf32, #tpu.memory_space<vmem>>) attributes {dimension_semantics = [], scalar_prefetch = 0 : i64, scratch_operands = 0 : i64, tpu.core_type = #tpu.core_type<tc>} {
    %c0 = arith.constant 0 : index
    %c0_0 = arith.constant 0 : index
    %0 = vector.load %arg0[%c0, %c0_0] : memref<8x1682xf32, #tpu.memory_space<vmem>>, vector<8x1682xf32>
    %c0_1 = arith.constant 0 : index
    %c0_2 = arith.constant 0 : index
    %1 = vector.load %arg1[%c0_1, %c0_2] : memref<8x1682xf32, #tpu.memory_space<vmem>>, vector<8x1682xf32>
    %cst = arith.constant 5.000000e-02 : f32
    %2 = vector.broadcast %cst : f32 to vector<8x1682xf32>
    %3 = arith.mulf %2, %1 : vector<8x1682xf32>
    %4 = arith.subf %0, %3 : vector<8x1682xf32>
    %c0_3 = arith.constant 0 : index
    %c0_4 = arith.constant 0 : index
    %5 = vector.load %arg2[%c0_3, %c0_4] : memref<8x1682xf32, #tpu.memory_space<vmem>>, vector<8x1682xf32>
    tpu.vector_store %arg2[%c0_3, %c0_4], %4 {strides = array<i32>} : memref<8x1682xf32, #tpu.memory_space<vmem>>, vector<8x1682xf32>,
    return
  }
}

</mosaic_0001>

<llo_original>
// kernel: _fcf_update_small.1
$region0: #{_fcf_update_small.1}
  #allocation0 [shape = 'u32[]', space=smem, size = 0x4, offset = 0x4, fixed_abs, tag = 'smem constant byte address 0x4 - core index']
  #allocation1 [shape = 'u32[144,128]{1,0:T(1,128)}', space=vmem, size = 0x12000, scoped, tag = 'internal scratch']
  %s0 = inlined_call_operand.hbm [shape: f32[8,1682], index: 0, kind: input, shape index: {}, may-alias: {0,2}]
  %s1 = inlined_call_operand.hbm [shape: f32[8,1682], index: 1, kind: input, shape index: {}]
  %s2 = inlined_call_operand.hbm [shape: f32[8,1682], index: 2, kind: output, shape index: {}, may-alias: {0,2}]
  %s3 = sld [smem:[#allocation0]]
  $region26: #{_fcf_update_small.1} parent=0
    _
  %s5 = ssub.s32 1, %s3
  %s6 = scalar_select 0, %s5, %s3
  $region1: #{_fcf_update_small.1} parent=0
    #allocation2 [shape = 'u8[57344]{0}', space=vmem, size = 0xe000, scoped, tag = 'input window, operand 0, single buffered']
    #allocation3 [shape = 's32[1]{0}', space=sflag, size = 0x4, scoped, tag = 'scoped memory for _fcf_update_small.1']
    #allocation4 [shape = 's32[1]{0}', space=sflag, size = 0x4, scoped, tag = 'scoped memory for _fcf_update_small.1']
    #allocation5 [shape = 'u8[57344]{0}', space=vmem, size = 0xe000, scoped, tag = 'input window, operand 1, single buffered']
    #allocation6 [shape = 's32[1]{0}', space=sflag, size = 0x4, scoped, tag = 'scoped memory for _fcf_update_small.1']
    #allocation7 [shape = 'u8[57344]{0}', space=vmem, size = 0xe000, scoped, tag = 'output window, operand 0, single buffered']
    %7 = vsyncpa [#allocation3], 0
    %8 = vsyncpa [#allocation6], 0
    %9 = vsyncpa [#allocation4], 0
    // Predicated region
    $region2: #{_fcf_update_small.1} parent=1 // pred_check
      _
    $region3: #{_fcf_update_small.1} parent=1 // pred_check_branch
      %11 = sbr.rel (0) target = $region5
    $region4: #{_fcf_update_small.1} parent=1 // pred_region
      %s13 = ssub.s32 1792, 1792
      %14 = vsyncadd [#allocation3], %s13
      %s16 = sshll.u32 [#allocation2], 4
      %s17 = int_to_ptr.vmem [resolvable:$true] %s16
      %19 = dma.hbm_to_vmem [thread:$0]  %s0, 1792, %s17, [#allocation3]
    $region5: #{_fcf_update_small.1} parent=1 // pred_fallthru
      _
    // Predicated region
    $region6: #{_fcf_update_small.1} parent=1 // pred_check
      _
    $region7: #{_fcf_update_small.1} parent=1 // pred_check_branch
      %21 = sbr.rel (0) target = $region9
    $region8: #{_fcf_update_small.1} parent=1 // pred_region
      %s23 = ssub.s32 1792, 1792
      %24 = vsyncadd [#allocation6], %s23
      %s26 = sshll.u32 [#allocation5], 4
      %s27 = int_to_ptr.vmem [resolvable:$true] %s26
      %29 = dma.hbm_to_vmem [thread:$0]  %s1, 1792, %s27, [#allocation6]
    $region9: #{_fcf_update_small.1} parent=1 // pred_fallthru
      _
    // Predicated region
    $region10: #{_fcf_update_small.1} parent=1 // pred_check
      _
    $region11: #{_fcf_update_small.1} parent=1 // pred_check_branch
      %31 = sbr.rel (0) target = $region13
    $region12: #{_fcf_update_small.1} parent=1 // pred_region
      %32 = dma.done [#allocation3], 1792
    $region13: #{_fcf_update_small.1} parent=1 // pred_fallthru
      _
    // Predicated region
    $region14: #{_fcf_update_small.1} parent=1 // pred_check
      _
    $region15: #{_fcf_update_small.1} parent=1 // pred_check_branch
      %34 = sbr.rel (0) target = $region17
    $region16: #{_fcf_update_small.1} parent=1 // pred_region
      %35 = dma.done [#allocation6], 1792
    $region17: #{_fcf_update_small.1} parent=1 // pred_fallthru
      _
    %v36 = vld [vmem:[#allocation2] sm:$0xff]
    %v37 = vld [vmem:[#allocation2 + $0x8] sm:$0xff]
    %v38 = vld [vmem:[#allocation2 + $0x10] sm:$0xff]
    %v39 = vld [vmem:[#allocation2 + $0x18] sm:$0xff]
    %v40 = vld [vmem:[#allocation2 + $0x20] sm:$0xff]
    %v41 = vld [vmem:[#allocation2 + $0x28] sm:$0xff]
    %v42 = vld [vmem:[#allocation2 + $0x30] sm:$0xff]
    %v43 = vld [vmem:[#allocation2 + $0x38] sm:$0xff]
    %v44 = vld [vmem:[#allocation2 + $0x40] sm:$0xff]
    %v45 = vld [vmem:[#allocation2 + $0x48] sm:$0xff]
    %v46 = vld [vmem:[#allocation2 + $0x50] sm:$0xff]
    %v47 = vld [vmem:[#allocation2 + $0x58] sm:$0xff]
    %v48 = vld [vmem:[#allocation2 + $0x60] sm:$0xff]
    %v49 = vld [vmem:[#allocation2 + $0x68] sm:$0xff]
    %v50 = vld [vmem:[#allocation5] sm:$0xff]
    %v51 = vld [vmem:[#allocation5 + $0x8] sm:$0xff]
    %v52 = vld [vmem:[#allocation5 + $0x10] sm:$0xff]
    %v53 = vld [vmem:[#allocation5 + $0x18] sm:$0xff]
    %v54 = vld [vmem:[#allocation5 + $0x20] sm:$0xff]
    %v55 = vld [vmem:[#allocation5 + $0x28] sm:$0xff]
    %v56 = vld [vmem:[#allocation5 + $0x30] sm:$0xff]
    %v57 = vld [vmem:[#allocation5 + $0x38] sm:$0xff]
    %v58 = vld [vmem:[#allocation5 + $0x40] sm:$0xff]
    %v59 = vld [vmem:[#allocation5 + $0x48] sm:$0xff]
    %v60 = vld [vmem:[#allocation5 + $0x50] sm:$0xff]
    %v61 = vld [vmem:[#allocation5 + $0x58] sm:$0xff]
    %v62 = vld [vmem:[#allocation5 + $0x60] sm:$0xff]
    %v63 = vld [vmem:[#allocation5 + $0x68] sm:$0xff]
    %v64 = vmul.f32 %v50, 0.05
    %v65 = vmul.f32 %v51, 0.05
    %v66 = vmul.f32 %v52, 0.05
    %v67 = vmul.f32 %v53, 0.05
    %v68 = vmul.f32 %v54, 0.05
    %v69 = vmul.f32 %v55, 0.05
    %v70 = vmul.f32 %v56, 0.05
    %v71 = vmul.f32 %v57, 0.05
    %v72 = vmul.f32 %v58, 0.05
    %v73 = vmul.f32 %v59, 0.05
    %v74 = vmul.f32 %v60, 0.05
    %v75 = vmul.f32 %v61, 0.05
    %v76 = vmul.f32 %v62, 0.05
    %v77 = vmul.f32 %v63, 0.05
    %v78 = vsub.f32 %v36, %v64
    %v79 = vsub.f32 %v37, %v65
    %v80 = vsub.f32 %v38, %v66
    %v81 = vsub.f32 %v39, %v67
    %v82 = vsub.f32 %v40, %v68
    %v83 = vsub.f32 %v41, %v69
    %v84 = vsub.f32 %v42, %v70
    %v85 = vsub.f32 %v43, %v71
    %v86 = vsub.f32 %v44, %v72
    %v87 = vsub.f32 %v45, %v73
    %v88 = vsub.f32 %v46, %v74
    %v89 = vsub.f32 %v47, %v75
    %v90 = vsub.f32 %v48, %v76
    %v91 = vsub.f32 %v49, %v77
    %92 = vst [vmem:[#allocation7] sm:$0xff] %v78
    %93 = vst [vmem:[#allocation7 + $0x8] sm:$0xff] %v79
    %94 = vst [vmem:[#allocation7 + $0x10] sm:$0xff] %v80
    %95 = vst [vmem:[#allocation7 + $0x18] sm:$0xff] %v81
    %96 = vst [vmem:[#allocation7 + $0x20] sm:$0xff] %v82
    %97 = vst [vmem:[#allocation7 + $0x28] sm:$0xff] %v83
    %98 = vst [vmem:[#allocation7 + $0x30] sm:$0xff] %v84
    %99 = vst [vmem:[#allocation7 + $0x38] sm:$0xff] %v85
    %100 = vst [vmem:[#allocation7 + $0x40] sm:$0xff] %v86
    %101 = vst [vmem:[#allocation7 + $0x48] sm:$0xff] %v87
    %102 = vst [vmem:[#allocation7 + $0x50] sm:$0xff] %v88
    %103 = vst [vmem:[#allocation7 + $0x58] sm:$0xff] %v89
    %104 = vst [vmem:[#allocation7 + $0x60] sm:$0xff] %v90
    %vm105 = vcmask 146432
    %106 = vst.msk [vmem:[#allocation7 + $0x68] sm:$0xff] %vm105, %v91
    // Predicated region
    $region18: #{_fcf_update_small.1} parent=1 // pred_check
      _
    $region19: #{_fcf_update_small.1} parent=1 // pred_check_branch
      %108 = sbr.rel (0) target = $region21
    $region20: #{_fcf_update_small.1} parent=1 // pred_region
      %s110 = ssub.s32 1792, 1792
      %111 = vsyncadd [#allocation4], %s110
      %s113 = sshll.u32 [#allocation7], 4
      %s114 = int_to_ptr.vmem [resolvable:$true] %s113
      %116 = dma.vmem_to_hbm [thread:$0]  %s114, 1792, %s2, [#allocation4]
    $region21: #{_fcf_update_small.1} parent=1 // pred_fallthru
      _
    // Predicated region
    $region22: #{_fcf_update_small.1} parent=1 // pred_check
      _
    $region23: #{_fcf_update_small.1} parent=1 // pred_check_branch
      %118 = sbr.rel (0) target = $region25
    $region24: #{_fcf_update_small.1} parent=1 // pred_region
      %119 = dma.done [#allocation4], 1792
    $region25: #{_fcf_update_small.1} parent=1 // pred_fallthru
      _
    %120 = vsyncpa [#allocation3], 1
    %121 = vsyncpa [#allocation6], 1
    %122 = vsyncpa [#allocation4], 1

</llo_original>
